<compile_context>
chip_gen: v5e
topology: v5e:2x2
jax: 0.10.0
libtpu: 0.0.40
codegen_flags: <defaults>
</compile_context>

<pallas_src>
import functools

import jax
import jax.numpy as jnp
from jax.experimental import pallas as pl
from jax.experimental.pallas import tpu as pltpu

_LANES = 128          # lane-dense last dim (one full vreg of lanes)
_TILE_ROWS = 8192     # max tile rows: (8192, 128) f32 = 4 MiB per input tile
_NUM_CORES = 2        # leading "parallel" grid axis (both TCs on v7x)


def _round_up(x, m):
    return ((x + m - 1) // m) * m


def _iou_sums_kernel(o_ref, m_ref, inter_ref, total_ref, *,
                     tiles_per_core, total_elems, need_mask):
    p = pl.program_id(0)   # "parallel" (core) axis
    i = pl.program_id(1)   # sequential reduction axis

    @pl.when(i == 0)
    def _init():
        inter_ref[...] = jnp.zeros_like(inter_ref)
        total_ref[...] = jnp.zeros_like(total_ref)

    s = jax.nn.sigmoid(o_ref[...].astype(jnp.float32))
    m = m_ref[...].astype(jnp.float32)
    tr = s.shape[0]

    if need_mask:
        # Static Python branch: only emitted when some tile covers padded /
        # out-of-bounds elements.  The mask is derived purely from the grid
        # position, so it is correct regardless of what the boundary DMA put
        # in the out-of-range part of the VMEM block.
        tile_idx = p * tiles_per_core + i
        row_idx = tile_idx * tr + jax.lax.broadcasted_iota(jnp.int32, s.shape, 0)
        full_rows = total_elems // _LANES
        tail = total_elems % _LANES
        valid = row_idx < full_rows
        if tail:
            col_idx = jax.lax.broadcasted_iota(jnp.int32, s.shape, 1)
            valid = valid | ((row_idx == full_rows) & (col_idx < tail))
        s = jnp.where(valid, s, 0.0)
        m = jnp.where(valid, m, 0.0)

    # Per-tile partial sums kept as cross-vreg VPU adds into the resident
    # (1, 8, 128) output block (one block per parallel index).  The final
    # cross-lane collapse happens in JAX on a tiny (2, 8, 128) array.
    inter_ref[...] += jnp.sum((s * m).reshape(tr // 8, 8, _LANES), axis=0)[None]
    total_ref[...] += jnp.sum((s + m).reshape(tr // 8, 8, _LANES), axis=0)[None]


def iou_loss(outputs, masks, smooth=1.0):
    """Pallas implementation of IoULoss.forward (outputs, masks in NCHW)."""
    assert masks.shape == outputs.shape
    total_elems = 1
    for d in outputs.shape:
        total_elems *= int(d)

    o_flat = outputs.reshape(-1)
    m_flat = masks.reshape(-1)

    rows0 = pl.cdiv(total_elems, _LANES)
    if total_elems % _LANES == 0 and rows0 % 8 == 0:
        # Common case (e.g. 256x256, 224x224, 512x512): pure reshape, no copy.
        rows_arr = rows0
    else:
        # Fallback: minimal zero-pad to an (8, 128)-aligned slab.  The kernel's
        # element mask makes the fill value irrelevant.
        rows_arr = _round_up(rows0, 8)
        pad = rows_arr * _LANES - total_elems
        o_flat = jnp.concatenate([o_flat, jnp.zeros((pad,), o_flat.dtype)])
        m_flat = jnp.concatenate([m_flat, jnp.zeros((pad,), m_flat.dtype)])

    o2 = o_flat.reshape(rows_arr, _LANES)
    m2 = m_flat.reshape(rows_arr, _LANES)

    # Balanced tiling: number of tiles is a multiple of _NUM_CORES and tiles
    # are (almost) equal sized, so no shape pays a ~2x padding blow-up.
    num_tiles_target = max(_NUM_CORES,
                           _round_up(pl.cdiv(rows_arr, _TILE_ROWS), _NUM_CORES))
    tile_r = _round_up(pl.cdiv(rows_arr, num_tiles_target), 8)
    num_blocks = pl.cdiv(rows_arr, tile_r)
    tiles_per_core = pl.cdiv(num_blocks, _NUM_CORES)
    coverage_rows = _NUM_CORES * tiles_per_core * tile_r
    need_mask = coverage_rows * _LANES != total_elems
    needs_clamp = _NUM_CORES * tiles_per_core > num_blocks

    if needs_clamp:
        # Some (p, i) pairs would point past the last block; clamp the DMA to a
        # real block (the kernel's grid-derived mask zeroes its contribution).
        def in_map(p, i):
            return (jnp.minimum(p * tiles_per_core + i, num_blocks - 1), 0)
    else:
        def in_map(p, i):
            return (p * tiles_per_core + i, 0)

    kernel = functools.partial(
        _iou_sums_kernel,
        tiles_per_core=tiles_per_core,
        total_elems=total_elems,
        need_mask=need_mask,
    )

    covered_elems = coverage_rows * _LANES
    cost = pl.CostEstimate(
        flops=5 * covered_elems,
        transcendentals=covered_elems,
        bytes_accessed=rows_arr * _LANES * (o2.dtype.itemsize + m2.dtype.itemsize)
        + 2 * _NUM_CORES * 8 * _LANES * 4,
    )

    inter_p, total_p = pl.pallas_call(
        kernel,
        out_shape=(
            jax.ShapeDtypeStruct((_NUM_CORES, 8, _LANES), jnp.float32),
            jax.ShapeDtypeStruct((_NUM_CORES, 8, _LANES), jnp.float32),
        ),
        grid_spec=pltpu.PrefetchScalarGridSpec(
            num_scalar_prefetch=0,
            grid=(_NUM_CORES, tiles_per_core),
            in_specs=[
                pl.BlockSpec((tile_r, _LANES), in_map),
                pl.BlockSpec((tile_r, _LANES), in_map),
            ],
            out_specs=(
                pl.BlockSpec((1, 8, _LANES), lambda p, i: (p, 0, 0)),
                pl.BlockSpec((1, 8, _LANES), lambda p, i: (p, 0, 0)),
            ),
        ),
        compiler_params=pltpu.CompilerParams(
            dimension_semantics=("parallel", "arbitrary"),
            vmem_limit_bytes=32 * 1024 * 1024,
        ),
        cost_estimate=cost,
    )(o2, m2)

    intersection = jnp.sum(inter_p)
    total_overlap = jnp.sum(total_p)
    union = total_overlap - intersection
    iou = (intersection + smooth) / (union + smooth)
    # iou is a scalar, so iou.mean() == iou
    return 1.0 - iou


def _reference_iou_loss(outputs, masks, smooth=1.0):
    o = jax.nn.sigmoid(outputs.astype(jnp.float32))
    m = masks.astype(jnp.float32)
    intersection = (o * m).sum()
    total = (o + m).sum()
    union = total - intersection
    iou = (intersection + smooth) / (union + smooth)
    return 1.0 - iou


if __name__ == "__main__":
    key = jax.random.PRNGKey(0)
    loss_fn = jax.jit(iou_loss)

    # Primary small case consistent with segmentation logits/masks: (N, 1, H, W).
    # Exercises the minimal-pad + fully-masked-extra-tile path.
    k1, k2 = jax.random.split(key)
    outputs = jax.random.normal(k1, (2, 1, 16, 16), dtype=jnp.float32)
    masks = (jax.random.uniform(k2, (2, 1, 16, 16)) > 0.5).astype(jnp.float32)
    loss = jax.block_until_ready(loss_fn(outputs, masks))
    ref = jax.block_until_ready(_reference_iou_loss(outputs, masks))
    assert jnp.allclose(loss, ref, atol=1e-5, rtol=1e-5), (loss, ref)

    # Non-multiple-of-128 shape: exercises the zero-pad fallback + element mask.
    k3, k4 = jax.random.split(k2)
    o_odd = jax.random.normal(k3, (3, 1, 17, 23), dtype=jnp.float32)
    m_odd = (jax.random.uniform(k4, (3, 1, 17, 23)) > 0.5).astype(jnp.float32)
    loss_odd = jax.block_until_ready(loss_fn(o_odd, m_odd))
    ref_odd = jax.block_until_ready(_reference_iou_loss(o_odd, m_odd))
    assert jnp.allclose(loss_odd, ref_odd, atol=1e-5, rtol=1e-5), (loss_odd, ref_odd)

    # Lane-aligned but not tile-aligned: zero-copy path with a masked partial
    # last block (no padding copy).
    k5, k6 = jax.random.split(k4)
    o_part = jax.random.normal(k5, (3, 1, 32, 32), dtype=jnp.float32)
    m_part = (jax.random.uniform(k6, (3, 1, 32, 32)) > 0.5).astype(jnp.float32)
    loss_part = jax.block_until_ready(loss_fn(o_part, m_part))
    ref_part = jax.block_until_ready(_reference_iou_loss(o_part, m_part))
    assert jnp.allclose(loss_part, ref_part, atol=1e-5, rtol=1e-5), (loss_part, ref_part)

    # Narrow-dtype inputs (bf16 logits, int8 masks): kernel upcasts internally,
    # callers save ~2.6x HBM bytes. Zero-copy, no mask, grid (2, 1).
    k7, k8 = jax.random.split(k6)
    o_bf16 = jax.random.normal(k7, (4, 1, 64, 64), dtype=jnp.float32).astype(jnp.bfloat16)
    m_i8 = (jax.random.uniform(k8, (4, 1, 64, 64)) > 0.5).astype(jnp.int8)
    loss_nd = jax.block_until_ready(loss_fn(o_bf16, m_i8))
    ref_nd = jax.block_until_ready(_reference_iou_loss(o_bf16, m_i8))
    assert jnp.allclose(loss_nd, ref_nd, atol=1e-4, rtol=1e-4), (loss_nd, ref_nd)

    # Larger multi-tile case: exercises init / accumulate across the inner
    # ("arbitrary") axis on both parallel slots, zero-copy, no masking.
    k9, k10 = jax.random.split(k8)
    o_big = jax.random.normal(k9, (9, 1, 512, 512), dtype=jnp.float32)
    m_big = (jax.random.uniform(k10, (9, 1, 512, 512)) > 0.5).astype(jnp.float32)
    loss_big = jax.block_until_ready(loss_fn(o_big, m_big))
    ref_big = jax.block_until_ready(_reference_iou_loss(o_big, m_big))
    assert jnp.allclose(loss_big, ref_big, atol=1e-5, rtol=1e-4), (loss_big, ref_big)

    print("KERNEL_OK")
</pallas_src>

<mosaic_0001>
module attributes {stable_mosaic.version = 11 : i64} {
  func.func @_iou_sums_kernel(%arg0: i32, %arg1: i32, %arg2: memref<8x128xf32, #tpu.memory_space<vmem>>, %arg3: memref<8x128xf32, #tpu.memory_space<vmem>>, %arg4: memref<1x8x128xf32, #tpu.memory_space<vmem>>, %arg5: memref<1x8x128xf32, #tpu.memory_space<vmem>>) attributes {dimension_semantics = [#tpu.dimension_semantics<parallel>, #tpu.dimension_semantics<arbitrary>], iteration_bounds = array<i64: 2, 1>, scalar_prefetch = 0 : i64, scratch_operands = 0 : i64, tpu.core_type = #tpu.core_type<tc>, window_params = [{transform_indices = @transform_0, window_bounds = array<i64: 8, 128>}, {transform_indices = @transform_1, window_bounds = array<i64: 8, 128>}, {transform_indices = @transform_2, window_bounds = array<i64: 1, 8, 128>}, {transform_indices = @transform_3, window_bounds = array<i64: 1, 8, 128>}]} {
    %c0_i32 = arith.constant 0 : i32
    %0 = arith.cmpi eq, %arg1, %c0_i32 : i32
    %1 = arith.extui %0 : i1 to i32
    %c0_i32_0 = arith.constant 0 : i32
    %2 = arith.cmpi ne, %1, %c0_i32_0 : i32
    scf.if %2 {
      %cst_20 = arith.constant 0.000000e+00 : f32
      %36 = vector.broadcast %cst_20 : f32 to vector<1x8x128xf32>
      %c0_21 = arith.constant 0 : index
      %c0_22 = arith.constant 0 : index
      %c0_23 = arith.constant 0 : index
      %37 = vector.load %arg4[%c0_21, %c0_22, %c0_23] : memref<1x8x128xf32, #tpu.memory_space<vmem>>, vector<1x8x128xf32>
      tpu.vector_store %arg4[%c0_21, %c0_22, %c0_23], %36 {strides = array<i32>} : memref<1x8x128xf32, #tpu.memory_space<vmem>>, vector<1x8x128xf32>,
      %cst_24 = arith.constant 0.000000e+00 : f32
      %38 = vector.broadcast %cst_24 : f32 to vector<1x8x128xf32>
      %c0_25 = arith.constant 0 : index
      %c0_26 = arith.constant 0 : index
      %c0_27 = arith.constant 0 : index
      %39 = vector.load %arg5[%c0_25, %c0_26, %c0_27] : memref<1x8x128xf32, #tpu.memory_space<vmem>>, vector<1x8x128xf32>
      tpu.vector_store %arg5[%c0_25, %c0_26, %c0_27], %38 {strides = array<i32>} : memref<1x8x128xf32, #tpu.memory_space<vmem>>, vector<1x8x128xf32>,
    } else {
    }
    %c0 = arith.constant 0 : index
    %c0_1 = arith.constant 0 : index
    %3 = vector.load %arg2[%c0, %c0_1] : memref<8x128xf32, #tpu.memory_space<vmem>>, vector<8x128xf32>
    %4 = arith.negf %3 : vector<8x128xf32>
    %5 = math.exp %4 : vector<8x128xf32>
    %cst = arith.constant 1.000000e+00 : f32
    %6 = vector.broadcast %cst : f32 to vector<8x128xf32>
    %7 = arith.addf %6, %5 : vector<8x128xf32>
    %8 = arith.divf %6, %7 : vector<8x128xf32>
    %c0_2 = arith.constant 0 : index
    %c0_3 = arith.constant 0 : index
    %9 = vector.load %arg3[%c0_2, %c0_3] : memref<8x128xf32, #tpu.memory_space<vmem>>, vector<8x128xf32>
    %c1_i32 = arith.constant 1 : i32
    %10 = arith.muli %arg0, %c1_i32 : i32
    %11 = arith.addi %10, %arg1 : i32
    %c8_i32 = arith.constant 8 : i32
    %12 = arith.muli %11, %c8_i32 : i32
    %13 = tpu.iota {dimensions = array<i32: 0>} : vector<8x128xi32>
    %14 = vector.broadcast %12 : i32 to vector<8x128xi32>
    %15 = arith.addi %14, %13 : vector<8x128xi32>
    %c4_i32 = arith.constant 4 : i32
    %16 = vector.broadcast %c4_i32 : i32 to vector<8x128xi32>
    %17 = arith.cmpi slt, %15, %16 : vector<8x128xi32>
    %cst_4 = arith.constant 0.000000e+00 : f32
    %18 = vector.broadcast %cst_4 : f32 to vector<8x128xf32>
    %19 = arith.select %17, %8, %18 : vector<8x128xi1>, vector<8x128xf32>
    %cst_5 = arith.constant 0.000000e+00 : f32
    %20 = vector.broadcast %cst_5 : f32 to vector<8x128xf32>
    %21 = arith.select %17, %9, %20 : vector<8x128xi1>, vector<8x128xf32>
    %c0_6 = arith.constant 0 : index
    %c0_7 = arith.constant 0 : index
    %c0_8 = arith.constant 0 : index
    %22 = vector.load %arg4[%c0_6, %c0_7, %c0_8] : memref<1x8x128xf32, #tpu.memory_space<vmem>>, vector<1x8x128xf32>
    %23 = arith.mulf %19, %21 : vector<8x128xf32>
    %24 = vector.shape_cast %23 : vector<8x128xf32> to vector<1x8x128xf32>
    %cst_9 = arith.constant dense<0.000000e+00> : vector<8x128xf32>
    %25 = vector.multi_reduction <add>, %24, %cst_9 [0] : vector<1x8x128xf32> to vector<8x128xf32>
    %26 = vector.shape_cast %25 : vector<8x128xf32> to vector<1x8x128xf32>
    %27 = arith.addf %22, %26 : vector<1x8x128xf32>
    %c0_10 = arith.constant 0 : index
    %c0_11 = arith.constant 0 : index
    %c0_12 = arith.constant 0 : index
    %28 = vector.load %arg4[%c0_10, %c0_11, %c0_12] : memref<1x8x128xf32, #tpu.memory_space<vmem>>, vector<1x8x128xf32>
    tpu.vector_store %arg4[%c0_10, %c0_11, %c0_12], %27 {strides = array<i32>} : memref<1x8x128xf32, #tpu.memory_space<vmem>>, vector<1x8x128xf32>,
    %c0_13 = arith.constant 0 : index
    %c0_14 = arith.constant 0 : index
    %c0_15 = arith.constant 0 : index
    %29 = vector.load %arg5[%c0_13, %c0_14, %c0_15] : memref<1x8x128xf32, #tpu.memory_space<vmem>>, vector<1x8x128xf32>
    %30 = arith.addf %19, %21 : vector<8x128xf32>
    %31 = vector.shape_cast %30 : vector<8x128xf32> to vector<1x8x128xf32>
    %cst_16 = arith.constant dense<0.000000e+00> : vector<8x128xf32>
    %32 = vector.multi_reduction <add>, %31, %cst_16 [0] : vector<1x8x128xf32> to vector<8x128xf32>
    %33 = vector.shape_cast %32 : vector<8x128xf32> to vector<1x8x128xf32>
    %34 = arith.addf %29, %33 : vector<1x8x128xf32>
    %c0_17 = arith.constant 0 : index
    %c0_18 = arith.constant 0 : index
    %c0_19 = arith.constant 0 : index
    %35 = vector.load %arg5[%c0_17, %c0_18, %c0_19] : memref<1x8x128xf32, #tpu.memory_space<vmem>>, vector<1x8x128xf32>
    tpu.vector_store %arg5[%c0_17, %c0_18, %c0_19], %34 {strides = array<i32>} : memref<1x8x128xf32, #tpu.memory_space<vmem>>, vector<1x8x128xf32>,
    return
  }
  func.func @transform_0(%arg0: i32, %arg1: i32) -> (i32, i32) {
    %c1_i32 = arith.constant 1 : i32
    %0 = arith.muli %arg0, %c1_i32 : i32
    %1 = arith.addi %0, %arg1 : i32
    %c0_i32 = arith.constant 0 : i32
    %2 = arith.minsi %1, %c0_i32 : i32
    %c0_i32_0 = arith.constant 0 : i32
    %c0_i32_1 = arith.constant 0 : i32
    return %2, %c0_i32_0 : i32, i32
  }
  func.func @transform_1(%arg0: i32, %arg1: i32) -> (i32, i32) {
    %c1_i32 = arith.constant 1 : i32
    %0 = arith.muli %arg0, %c1_i32 : i32
    %1 = arith.addi %0, %arg1 : i32
    %c0_i32 = arith.constant 0 : i32
    %2 = arith.minsi %1, %c0_i32 : i32
    %c0_i32_0 = arith.constant 0 : i32
    %c0_i32_1 = arith.constant 0 : i32
    return %2, %c0_i32_0 : i32, i32
  }
  func.func @transform_2(%arg0: i32, %arg1: i32) -> (i32, i32, i32) {
    %c0_i32 = arith.constant 0 : i32
    %c0_i32_0 = arith.constant 0 : i32
    %c0_i32_1 = arith.constant 0 : i32
    return %arg0, %c0_i32, %c0_i32_0 : i32, i32, i32
  }
  func.func @transform_3(%arg0: i32, %arg1: i32) -> (i32, i32, i32) {
    %c0_i32 = arith.constant 0 : i32
    %c0_i32_0 = arith.constant 0 : i32
    %c0_i32_1 = arith.constant 0 : i32
    return %arg0, %c0_i32, %c0_i32_0 : i32, i32, i32
  }
}

</mosaic_0001>

<llo_original>
// kernel: iou_loss.1
$region0: #{iou_loss.1}
  #allocation0 [shape = 'u32[]', space=smem, size = 0x4, offset = 0x4, fixed_abs, tag = 'smem constant byte address 0x4 - core index']
  #allocation1 [shape = 'u32[72,128]{1,0:T(1,128)}', space=vmem, size = 0x9000, scoped, tag = 'internal scratch']
  %s0 = inlined_call_operand.vmem [shape: f32[8,128], index: 0, kind: input, shape index: {}]
  %s1 = inlined_call_operand.vmem [shape: f32[8,128], index: 1, kind: input, shape index: {}]
  %s2 = inlined_call_operand.vmem [shape: f32[2,8,128], index: 2, kind: output, shape index: {0}]
  %s3 = inlined_call_operand.vmem [shape: f32[2,8,128], index: 3, kind: output, shape index: {1}]
  %4 = xla_tuple %s2, %s3
  %s5 = sld [smem:[#allocation0]]
  $region53: #{iou_loss.1} parent=0
    _
  %s7 = ssub.s32 1, %s5
  %s8 = scalar_select 0, %s7, %s5
  loop: start=0, step=1, limit=4
  $region2: #{iou_loss.1} parent=0 // loop_pre_header
    _
  $region3: #{iou_loss.1} parent=0 // loop_header
    %s10 = sphi 0, %s14
    %p11 = scmp.ge.s32.totalorder %s10, 4
    %s17 = sphi 0, %s29
    %s18 = sphi 0, %s25
    %s19 = sphi 0, %s17
    %s20 = sphi 0, %s18
    %s21 = sphi 0, %s19
    %s22 = sphi 0, %s20
    %s38 = sphi 0, %s40
    %s41 = sphi 0, %s38
    %s42 = sphi 0, %s41
    %s58 = sphi 0, %s42
    %s70 = sphi 0, %s72
    %s73 = sphi 0, %s70
    %s74 = sphi 0, %s73
    %s90 = sphi 0, %s74
    %s96 = sphi 0, %s98
    %s99 = sphi 0, %s96
    %s100 = sphi 0, %s99
    %s116 = sphi 0, %s100
    %s122 = sphi 0, %s124
    %s125 = sphi 0, %s122
    %s126 = sphi 0, %s125
    %s142 = sphi 0, %s126
  $region4: #{iou_loss.1} parent=0 // loop_header_branch
    %13 = sbr.rel (%p11) target = $region8
  $region5: #{iou_loss.1} parent=0 // loop_body
    %s15 = ssub.s32 %s10, 1
    %s16 = ssub.s32 %s10, 2
    %s23 = sadd.s32 1, %s18
    %p24 = scmp.ge.s32.totalorder %s23, 1
    %s25 = scalar_select %p24, 0, %s23
    %s26 = sadd.s32 1, %s17
    %s27 = scalar_select %p24, %s26, %s17
    %p28 = scmp.ge.s32.totalorder %s27, 2
    %s29 = scalar_select %p28, 0, %s27
    %s30 = sadd.s32 %s17, %s18
    %p31 = scmp.lt.s32.totalorder %s30, 0
    %s32 = scalar_select %p31, %s30, 0
    %s33 = sadd.s32 %s29, %s25
    %p34 = scmp.lt.s32.totalorder %s33, 0
    %s35 = scalar_select %p34, %s33, 0
    %s36 = ssub.s32 %s32, %s35
    %p37 = scmp.eq.s32.totalorder %s36, 0
    %s39 = sadd.s32 %s38, 1
    %s40 = scalar_select %p37, %s38, %s39
    %p43 = pneg %p37
    %p44 = scmp.eq.s32.totalorder %s10, 1
    %p45 = por %p43, %p44
    %p46 = scmp.ne.s32.totalorder %s38, %s41
    %p47 = scmp.eq.s32.totalorder %s10, 0
    %p48 = por %p46, %p47
    %p49 = scmp.ne.s32.totalorder %s38, %s41
    %p50 = scmp.eq.s32.totalorder %s15, 1
    %p51 = por %p49, %p50
    %p52 = scmp.ne.s32.totalorder %s41, %s42
    %p53 = scmp.eq.s32.totalorder %s15, 0
    %p54 = por %p52, %p53
    %p55 = scmp.ne.s32.totalorder %s41, %s42
    %p56 = scmp.eq.s32.totalorder %s16, 1
    %p57 = por %p55, %p56
    %p59 = scmp.ne.s32.totalorder %s42, %s58
    %p60 = scmp.eq.s32.totalorder %s16, 0
    %p61 = por %p59, %p60
    %s62 = sadd.s32 %s17, %s18
    %p63 = scmp.lt.s32.totalorder %s62, 0
    %s64 = scalar_select %p63, %s62, 0
    %s65 = sadd.s32 %s29, %s25
    %p66 = scmp.lt.s32.totalorder %s65, 0
    %s67 = scalar_select %p66, %s65, 0
    %s68 = ssub.s32 %s64, %s67
    %p69 = scmp.eq.s32.totalorder %s68, 0
    %s71 = sadd.s32 %s70, 1
    %s72 = scalar_select %p69, %s70, %s71
    %p75 = pneg %p69
    %p76 = scmp.eq.s32.totalorder %s10, 1
    %p77 = por %p75, %p76
    %p78 = scmp.ne.s32.totalorder %s70, %s73
    %p79 = scmp.eq.s32.totalorder %s10, 0
    %p80 = por %p78, %p79
    %p81 = scmp.ne.s32.totalorder %s70, %s73
    %p82 = scmp.eq.s32.totalorder %s15, 1
    %p83 = por %p81, %p82
    %p84 = scmp.ne.s32.totalorder %s73, %s74
    %p85 = scmp.eq.s32.totalorder %s15, 0
    %p86 = por %p84, %p85
    %p87 = scmp.ne.s32.totalorder %s73, %s74
    %p88 = scmp.eq.s32.totalorder %s16, 1
    %p89 = por %p87, %p88
    %p91 = scmp.ne.s32.totalorder %s74, %s90
    %p92 = scmp.eq.s32.totalorder %s16, 0
    %p93 = por %p91, %p92
    %s94 = ssub.s32 %s17, %s29
    %p95 = scmp.eq.s32.totalorder %s94, 0
    %s97 = sadd.s32 %s96, 1
    %s98 = scalar_select %p95, %s96, %s97
    %p101 = pneg %p95
    %p102 = scmp.eq.s32.totalorder %s10, 1
    %p103 = por %p101, %p102
    %p104 = scmp.ne.s32.totalorder %s96, %s99
    %p105 = scmp.eq.s32.totalorder %s10, 0
    %p106 = por %p104, %p105
    %p107 = scmp.ne.s32.totalorder %s96, %s99
    %p108 = scmp.eq.s32.totalorder %s15, 1
    %p109 = por %p107, %p108
    %p110 = scmp.ne.s32.totalorder %s99, %s100
    %p111 = scmp.eq.s32.totalorder %s15, 0
    %p112 = por %p110, %p111
    %p113 = scmp.ne.s32.totalorder %s99, %s100
    %p114 = scmp.eq.s32.totalorder %s16, 1
    %p115 = por %p113, %p114
    %p117 = scmp.ne.s32.totalorder %s100, %s116
    %p118 = scmp.eq.s32.totalorder %s16, 0
    %p119 = por %p117, %p118
    %s120 = ssub.s32 %s17, %s29
    %p121 = scmp.eq.s32.totalorder %s120, 0
    %s123 = sadd.s32 %s122, 1
    %s124 = scalar_select %p121, %s122, %s123
    %p127 = pneg %p121
    %p128 = scmp.eq.s32.totalorder %s10, 1
    %p129 = por %p127, %p128
    %p130 = scmp.ne.s32.totalorder %s122, %s125
    %p131 = scmp.eq.s32.totalorder %s10, 0
    %p132 = por %p130, %p131
    %p133 = scmp.ne.s32.totalorder %s122, %s125
    %p134 = scmp.eq.s32.totalorder %s15, 1
    %p135 = por %p133, %p134
    %p136 = scmp.ne.s32.totalorder %s125, %s126
    %p137 = scmp.eq.s32.totalorder %s15, 0
    %p138 = por %p136, %p137
    %p139 = scmp.ne.s32.totalorder %s125, %s126
    %p140 = scmp.eq.s32.totalorder %s16, 1
    %p141 = por %p139, %p140
    %p143 = scmp.ne.s32.totalorder %s126, %s142
    %p144 = scmp.eq.s32.totalorder %s16, 0
    %p145 = por %p143, %p144
    %p146 = scmp.le.s32.totalorder 1, %s10
    %p147 = scmp.lt.s32.totalorder %s10, 3
    %p148 = pnand %p146, %p147
    %p149 = pneg %p148
    // Predicated region
    $region9: #{iou_loss.1} parent=5 // pred_check
      _
    $region10: #{iou_loss.1} parent=5 // pred_check_branch
      %151 = sbr.rel (%p148) target = $region12
    $region11: #{iou_loss.1} parent=5 // pred_region
      %s152 = ssub.s32 %s10, 1
    $region12: #{iou_loss.1} parent=5 // pred_fallthru
      _
    %p153 = scmp.lt.s32.totalorder %s10, 2
    // Predicated region
    $region13: #{iou_loss.1} parent=5 // pred_check
      %p154 = pneg %p153
    $region14: #{iou_loss.1} parent=5 // pred_check_branch
      %156 = sbr.rel (%p154) target = $region16
    $region15: #{iou_loss.1} parent=5 // pred_region
      // Predicated region
      $region17: #{iou_loss.1} parent=15 // pred_check
        %p157 = pneg %p48
      $region18: #{iou_loss.1} parent=15 // pred_check_branch
        %159 = sbr.rel (%p157) target = $region20
      $region19: #{iou_loss.1} parent=15 // pred_region
        %s160 = sadd.s32 %s17, %s18
        %p161 = scmp.lt.s32.totalorder %s160, 0
        %s162 = scalar_select %p161, %s160, 0
        %p163 = scmp.lt.s32.totalorder %s162, 0
        %s164 = scalar_select %p163, %s162, 0
        %s165 = smul.addr %s164, 8
        %s166 = scalar_lea.vmem %s0, %s165
        %s167 = sadd.s32 %s17, %s18
        %p168 = scmp.lt.s32.totalorder %s167, 0
        %s169 = scalar_select %p168, %s167, 0
      $region20: #{iou_loss.1} parent=15 // pred_fallthru
        _
      // Predicated region
      $region21: #{iou_loss.1} parent=15 // pred_check
        %p170 = pneg %p80
      $region22: #{iou_loss.1} parent=15 // pred_check_branch
        %172 = sbr.rel (%p170) target = $region24
      $region23: #{iou_loss.1} parent=15 // pred_region
        %s173 = sadd.s32 %s17, %s18
        %p174 = scmp.lt.s32.totalorder %s173, 0
        %s175 = scalar_select %p174, %s173, 0
        %p176 = scmp.lt.s32.totalorder %s175, 0
        %s177 = scalar_select %p176, %s175, 0
        %s178 = smul.addr %s177, 8
        %s179 = scalar_lea.vmem %s1, %s178
        %s180 = sadd.s32 %s17, %s18
        %p181 = scmp.lt.s32.totalorder %s180, 0
        %s182 = scalar_select %p181, %s180, 0
      $region24: #{iou_loss.1} parent=15 // pred_fallthru
        _
    $region16: #{iou_loss.1} parent=5 // pred_fallthru
      _
    %p183 = scmp.le.s32.totalorder 1, %s10
    %p184 = scmp.lt.s32.totalorder %s10, 3
    %p185 = pnand %p183, %p184
    %p186 = pneg %p185
    // Predicated region
    $region25: #{iou_loss.1} parent=5 // pred_check
      _
    $region26: #{iou_loss.1} parent=5 // pred_check_branch
      %188 = sbr.rel (%p185) target = $region28
    $region27: #{iou_loss.1} parent=5 // pred_region
      %s189 = ssub.s32 %s10, 1
      %s190 = sadd.s32 %s19, %s20
      %p191 = scmp.lt.s32.totalorder %s190, 0
      %s192 = scalar_select %p191, %s190, 0
      %p193 = scmp.lt.s32.totalorder %s192, 0
      %s194 = scalar_select %p193, %s192, 0
      %s195 = smul.addr %s194, 8
      %s196 = scalar_lea.vmem %s0, %s195
      %p197 = pneg %p54
      %p198 = pneg %p51
      %s199 = sadd.s32 %s19, %s20
      %p200 = scmp.lt.s32.totalorder %s199, 0
      %s201 = scalar_select %p200, %s199, 0
      %p202 = scmp.lt.s32.totalorder %s201, 0
      %s203 = scalar_select %p202, %s201, 0
      %s204 = smul.addr %s203, 8
      %s205 = scalar_lea.vmem %s1, %s204
      %p206 = pneg %p86
      %p207 = pneg %p83
      %p208 = pneg %p112
      %p209 = pneg %p109
      %p210 = scmp.lt.s32.totalorder %s19, 1
      %s211 = scalar_select %p210, %s19, 1
      %s212 = smul.addr %s211, 8
      %s213 = scalar_lea.vmem %s2, %s212
      %p214 = pneg %p138
      %p215 = pneg %p135
      %p216 = scmp.lt.s32.totalorder %s19, 1
      %s217 = scalar_select %p216, %s19, 1
      %s218 = smul.addr %s217, 8
      %s219 = scalar_lea.vmem %s3, %s218
      %s220 = sadd.s32 %s19, %s20
      %p221 = scmp.lt.s32.totalorder %s220, 0
      %s222 = scalar_select %p221, %s220, 0
      %p223 = scmp.lt.s32.totalorder %s222, 0
      %s224 = scalar_select %p223, %s222, 0
      %s225 = smul.addr %s224, 8
      %s226 = scalar_lea.vmem %s0, %s225
      %s227 = sadd.s32 %s19, %s20
      %p228 = scmp.lt.s32.totalorder %s227, 0
      %s229 = scalar_select %p228, %s227, 0
      %s230 = sadd.s32 %s19, %s20
      %p231 = scmp.lt.s32.totalorder %s230, 0
      %s232 = scalar_select %p231, %s230, 0
      %p233 = scmp.lt.s32.totalorder %s232, 0
      %s234 = scalar_select %p233, %s232, 0
      %s235 = smul.addr %s234, 8
      %s236 = scalar_lea.vmem %s1, %s235
      %s237 = sadd.s32 %s19, %s20
      %p238 = scmp.lt.s32.totalorder %s237, 0
      %s239 = scalar_select %p238, %s237, 0
      %p240 = scmp.lt.s32.totalorder %s19, 1
      %s241 = scalar_select %p240, %s19, 1
      %s242 = smul.addr %s241, 8
      %s243 = scalar_lea.vmem %s2, %s242
      %p244 = scmp.lt.s32.totalorder %s19, 1
      %s245 = scalar_select %p244, %s19, 1
      %s246 = smul.addr %s245, 8
      %s247 = scalar_lea.vmem %s3, %s246
      %p248 = scmp.eq.s32.totalorder %s20, 0
      // Predicated region
      $region29: #{iou_loss.1} parent=27 // pred_check
        %p249 = pneg %p248
      $region30: #{iou_loss.1} parent=27 // pred_check_branch
        %251 = sbr.rel (%p249) target = $region32
      $region31: #{iou_loss.1} parent=27 // pred_region
        %252 = vst [vmem:[%s243] sm:$0xff] 0.0
        %253 = vst [vmem:[%s247] sm:$0xff] 0.0
      $region32: #{iou_loss.1} parent=27 // pred_fallthru
        _
      %v254 = vld [vmem:[%s226] sm:$0xff]
      %v255 = vxor.u32 %v254, 2147483648
      %v256 = vmul.f32 %v255, 1.442695
      %v257 = vpow.pop %v256
      %v258 = vadd.f32 %v257, 1.0
      %v259 = vrcp.pop %v258
      %v260 = vmul.f32 %v258, %v259
      %v261 = vsub.f32 1.0, %v260
      %v262 = vmul.f32 %v259, %v261
      %v263 = vadd.f32 %v259, %v262
      %vm264 = vweird.f32 %v258
      %vm265 = vweird.f32 %v259
      %vm266 = vmor %vm264, %vm265
      %v267 = vsel %vm266, %v259, %v263
      %v268 = vand.u32 2147483647, %v258
      %vm269 = vcmp.eq.f32.partialorder %v268, 8.507059e+37
      %v270 = vand.u32 %v258, 2147483648
      %v271 = vor.u32 1.1754944e-38, %v270
      %v272 = vsel %vm269, %v271, %v267
      %v273 = vmul.f32 1.0, %v272
      %v274 = vld [vmem:[%s236] sm:$0xff]
      %s275 = sadd.s32 %s19, %s20
      %s276 = smul.u32 %s275, 8
      %v277 = vlaneseq
      %v278 = vshrl.u32 %v277, 7
      %v279 = vstv %s276
      %v280 = vadd.s32 %v279, %v278
      %vm281 = vcmp.lt.s32.totalorder %v280, 4
      %v282 = vsel %vm281, %v273, 0.0
      %v283 = vsel %vm281, %v274, 0.0
      %v284 = vld [vmem:[%s243] sm:$0xff]
      %v285 = vmul.f32 %v282, %v283
      %v286 = vadd.f32 %v285, 0.0
      %v287 = vadd.f32 %v284, %v286
      %288 = vst [vmem:[%s243] sm:$0xff] %v287
      %v289 = vld [vmem:[%s247] sm:$0xff]
      %v290 = vadd.f32 %v282, %v283
      %v291 = vadd.f32 %v290, 0.0
      %v292 = vadd.f32 %v289, %v291
      %293 = vst [vmem:[%s247] sm:$0xff] %v292
      %p294 = scmp.lt.s32.totalorder %s19, 1
      %s295 = scalar_select %p294, %s19, 1
      %s296 = smul.addr %s295, 8
      %s297 = scalar_lea.vmem %s2, %s296
      %p298 = scmp.lt.s32.totalorder %s19, 1
      %s299 = scalar_select %p298, %s19, 1
      %s300 = smul.addr %s299, 8
      %s301 = scalar_lea.vmem %s3, %s300
      // Predicated region
      $region33: #{iou_loss.1} parent=27 // pred_check
        %p302 = pneg %p109
      $region34: #{iou_loss.1} parent=27 // pred_check_branch
        %304 = sbr.rel (%p302) target = $region36
      $region35: #{iou_loss.1} parent=27 // pred_region
        _
      $region36: #{iou_loss.1} parent=27 // pred_fallthru
        _
      // Predicated region
      $region37: #{iou_loss.1} parent=27 // pred_check
        %p305 = pneg %p135
      $region38: #{iou_loss.1} parent=27 // pred_check_branch
        %307 = sbr.rel (%p305) target = $region40
      $region39: #{iou_loss.1} parent=27 // pred_region
        _
      $region40: #{iou_loss.1} parent=27 // pred_fallthru
        _
    $region28: #{iou_loss.1} parent=5 // pred_fallthru
      _
    %p308 = scmp.le.s32.totalorder 2, %s10
    // Predicated region
    $region41: #{iou_loss.1} parent=5 // pred_check
      %p309 = pneg %p308
    $region42: #{iou_loss.1} parent=5 // pred_check_branch
      %311 = sbr.rel (%p309) target = $region44
    $region43: #{iou_loss.1} parent=5 // pred_region
      %s312 = ssub.s32 %s10, 2
      // Predicated region
      $region45: #{iou_loss.1} parent=43 // pred_check
        %p313 = pneg %p115
      $region46: #{iou_loss.1} parent=43 // pred_check_branch
        %315 = sbr.rel (%p313) target = $region48
      $region47: #{iou_loss.1} parent=43 // pred_region
        %p316 = scmp.lt.s32.totalorder %s21, 1
        %s317 = scalar_select %p316, %s21, 1
        %s318 = smul.addr %s317, 8
        %s319 = scalar_lea.vmem %s2, %s318
      $region48: #{iou_loss.1} parent=43 // pred_fallthru
        _
      // Predicated region
      $region49: #{iou_loss.1} parent=43 // pred_check
        %p320 = pneg %p141
      $region50: #{iou_loss.1} parent=43 // pred_check_branch
        %322 = sbr.rel (%p320) target = $region52
      $region51: #{iou_loss.1} parent=43 // pred_region
        %p323 = scmp.lt.s32.totalorder %s21, 1
        %s324 = scalar_select %p323, %s21, 1
        %s325 = smul.addr %s324, 8
        %s326 = scalar_lea.vmem %s3, %s325
      $region52: #{iou_loss.1} parent=43 // pred_fallthru
        _
    $region44: #{iou_loss.1} parent=5 // pred_fallthru
      _
  $region6: #{iou_loss.1} parent=0 // loop_footer
    %s14 = sadd.s32 1, %s10
  $region7: #{iou_loss.1} parent=0 // loop_footer_branch
    %9 = sbr.rel target = $region3
  $region8: #{iou_loss.1} parent=0 // loop_exit
    _

</llo_original>
